<compile_context>
chip_gen: v6e
topology: v6e:2x2x1
jax: 0.10.0
libtpu: 0.0.40
codegen_flags: <defaults>
</compile_context>

<pallas_src>
import math

import jax
import jax.numpy as jnp
from jax.experimental import pallas as pl
from jax.experimental.pallas import tpu as pltpu


def _round_up(x: int, m: int) -> int:
    return ((x + m - 1) // m) * m


def _cdiv(a: int, b: int) -> int:
    return (a + b - 1) // b


# ----------------------------------------------------------------------------- kernel
def ffn_kernel(x_ref, w1_ref, b1_ref, w2_ref, b2_ref, o_ref, acc_ref):
    k = pl.program_id(1)

    @pl.when(k == 0)
    def _():
        acc_ref[...] = jnp.zeros_like(acc_ref)

    # hidden_k = relu(x @ w1[:, k_tile] + b1[k_tile])   -- MXU matmul, f32 accumulate.
    # Bias-add + ReLU stay in f32 on the VPU (v5e VPU has no bf16 path anyway).
    h = jnp.dot(x_ref[...], w1_ref[...], preferred_element_type=jnp.float32)
    h = jnp.maximum(h + b1_ref[...], 0.0)
    # (dropout == identity at inference)

    # Accumulate partial second matmul: acc += hidden_k @ w2[k_tile, :]
    # The f32 hidden tile is downcast to the weight dtype for the MXU (inference-ok).
    acc_ref[...] += jnp.dot(h.astype(w2_ref.dtype), w2_ref[...],
                            preferred_element_type=jnp.float32)

    @pl.when(k == pl.num_programs(1) - 1)
    def _():
        o_ref[...] = (acc_ref[...] + b2_ref[...]).astype(o_ref.dtype)


# ------------------------------------------------------------------- tile/VMEM policy
def _tpu_vmem_info():
    """(scoped vmem limit to request, is_small_vmem_chip)."""
    try:
        info = pltpu.get_tpu_info()
        vmem_phys = int(getattr(info, "vmem_capacity_bytes", 64 << 20))
        if vmem_phys <= 0:
            vmem_phys = 64 << 20
    except Exception:
        vmem_phys = 64 << 20  # conservative fallback (v7x-sized VMEM)
    vmem_limit = min((vmem_phys * 3) // 4, 100 << 20)   # 48 MiB on v7x, 96 MiB on v5e/v6e
    small_vmem = vmem_phys <= (64 << 20) + (1 << 20)
    return vmem_limit, small_vmem


def _select_tiles(dm_p, dff_p0, x_itemsize, w_itemsize, out_itemsize):
    """Pick (tm_target, tk_ff, num_k, vmem_limit) that fit the per-generation VMEM."""
    vmem_limit, small_vmem = _tpu_vmem_info()
    if small_vmem:   # v7x-class: 64 MiB VMEM per TensorCore
        candidates = [(512, 256), (256, 256), (256, 128), (128, 128)]
    else:            # v5e / v6e: 128 MiB VMEM
        candidates = [(1024, 256), (512, 512), (512, 256),
                      (256, 256), (256, 128), (128, 128)]
    budget = int(vmem_limit * 0.85)

    def usage(tm, tk):
        return (2 * tm * dm_p * x_itemsize        # x tile (double-buffered)
                + 2 * tm * dm_p * out_itemsize    # out tile (double-buffered)
                + 4 * tm * dm_p                   # f32 accumulator scratch
                + 2 * dm_p * tk * w_itemsize      # w1 tile (double-buffered)
                + 2 * tk * dm_p * w_itemsize      # w2 tile (double-buffered)
                + 4 * tm * tk                     # live f32 hidden tile
                + 8 * (tk + dm_p) * 4 * 2)        # biases (sublane-padded), slack

    def resolve_tk(tk_target):
        # k-tiles divide d_ff with <=128 extra padding (no round-up to a 512 multiple).
        num_k = _cdiv(dff_p0, min(tk_target, dff_p0))
        tk = _round_up(_cdiv(dff_p0, num_k), 128)
        return tk, num_k

    for tm_t, tk_t in candidates:
        tk, num_k = resolve_tk(tk_t)
        if usage(tm_t, tk) <= budget:
            return tm_t, tk, num_k, vmem_limit
    tm_t, tk_t = candidates[-1]
    tk, num_k = resolve_tk(tk_t)
    return tm_t, tk, num_k, vmem_limit


# ------------------------------------------------------------------ params preparation
def _pad2d(a, rows, cols, dtype):
    a = a.astype(dtype)
    r, c = a.shape
    if r == rows and c == cols:
        return a
    return jnp.zeros((rows, cols), dtype).at[:r, :c].set(a)


def prepare_ffn_params(w1, b1, w2, b2, *, param_dtype=jnp.bfloat16,
                       compute_dtype=jnp.bfloat16):
    """Pad + cast the static FFN weights ONCE (outside the per-call path).

    w1: [d_model, d_ff], w2: [d_ff, d_model] (already transposed w.r.t. torch's
    nn.Linear weight layout). Biases stay f32 (tiny; bias-add happens in f32).
    """
    d_model, d_ff = w1.shape
    dm_p = _round_up(d_model, 128)
    dff_p0 = _round_up(d_ff, 128)

    x_it = jnp.dtype(compute_dtype).itemsize
    w_it = jnp.dtype(param_dtype).itemsize
    out_it = 4  # worst case (f32 output)
    tm_target, tk_ff, num_k, vmem_limit = _select_tiles(dm_p, dff_p0, x_it, w_it, out_it)
    dff_p = tk_ff * num_k

    return dict(
        w1=_pad2d(w1, dm_p, dff_p, param_dtype),
        b1=_pad2d(b1.reshape(1, -1), 1, dff_p, jnp.float32),
        w2=_pad2d(w2, dff_p, dm_p, param_dtype),
        b2=_pad2d(b2.reshape(1, -1), 1, dm_p, jnp.float32),
        d_model=d_model, d_ff=d_ff, dm_p=dm_p, dff_p=dff_p,
        tk_ff=tk_ff, tm_target=tm_target, vmem_limit=vmem_limit,
        compute_dtype=jnp.dtype(compute_dtype),
    )


# ------------------------------------------------------------------------ forward pass
def feed_forward_block(x, params):
    """x: [batch, seq, d_model] -> [batch, seq, d_model] (same dtype as x)."""
    batch, seq, d_model = x.shape
    assert d_model == params["d_model"]
    dm_p, dff_p, tk_ff = params["dm_p"], params["dff_p"], params["tk_ff"]
    compute_dtype = params["compute_dtype"]
    out_dtype = x.dtype
    M = batch * seq

    # Row tile: clamp to the data; if a single tile would cover a large M, split into
    # >=2 tiles so v7x's two TensorCores both get work (negligible cost on v5e/v6e).
    tm = min(params["tm_target"], _round_up(M, 16))
    if M >= 512 and _round_up(M, 16) <= tm:
        tm = _round_up(_cdiv(M, 2), 128)
    M_p = _round_up(M, tm)

    x2d = x.reshape(M, d_model).astype(compute_dtype)
    if (M_p, dm_p) != (M, d_model):
        x2d = jnp.zeros((M_p, dm_p), compute_dtype).at[:M, :d_model].set(x2d)

    w1p, b1p, w2p, b2p = params["w1"], params["b1"], params["w2"], params["b2"]
    n_m, n_k = M_p // tm, dff_p // tk_ff
    grid = (n_m, n_k)

    # Weights are re-streamed from HBM once per M tile; x read once, out written once.
    weight_bytes = (w1p.size * w1p.dtype.itemsize + w2p.size * w2p.dtype.itemsize
                    + b1p.size * b1p.dtype.itemsize + b2p.size * b2p.dtype.itemsize)
    cost = pl.CostEstimate(
        flops=4 * M_p * dm_p * dff_p,   # two matmuls
        transcendentals=0,
        bytes_accessed=(x2d.size * x2d.dtype.itemsize
                        + M_p * dm_p * jnp.dtype(out_dtype).itemsize
                        + n_m * weight_bytes))

    # NOTE: if a v7x trace shows exposed DMA waits at each k step, add
    # pipeline_mode=pl.Buffered(3) on the w1/w2 specs only (VMEM permitting).
    out2d = pl.pallas_call(
        ffn_kernel,
        out_shape=jax.ShapeDtypeStruct((M_p, dm_p), out_dtype),
        grid_spec=pltpu.PrefetchScalarGridSpec(
            num_scalar_prefetch=0,
            grid=grid,
            in_specs=[
                pl.BlockSpec((tm, dm_p), lambda i, k: (i, 0)),      # x rows (k-invariant)
                pl.BlockSpec((dm_p, tk_ff), lambda i, k: (0, k)),   # w1 column tile
                pl.BlockSpec((1, tk_ff), lambda i, k: (0, k)),      # b1 tile (f32)
                pl.BlockSpec((tk_ff, dm_p), lambda i, k: (k, 0)),   # w2 row tile
                pl.BlockSpec((1, dm_p), lambda i, k: (0, 0)),       # b2 (grid-invariant)
            ],
            out_specs=pl.BlockSpec((tm, dm_p), lambda i, k: (i, 0)),
            scratch_shapes=[pltpu.VMEM((tm, dm_p), jnp.float32)],   # f32 accumulator
        ),
        compiler_params=pltpu.CompilerParams(
            dimension_semantics=("parallel", "arbitrary"),
            vmem_limit_bytes=params["vmem_limit"],
        ),
        cost_estimate=cost,
    )(x2d, w1p, b1p, w2p, b2p)

    if (M_p, dm_p) != (M, d_model):
        out2d = out2d[:M, :d_model]
    return out2d.reshape(batch, seq, d_model)


# --------------------------------------------------------------------------------- init
def init_params(key, d_model, d_ff, dtype=jnp.float32):
    """Deterministic PyTorch-style (uniform +/- 1/sqrt(fan_in)) init (f32 masters)."""
    k1, k2, k3, k4 = jax.random.split(key, 4)
    bound1 = 1.0 / math.sqrt(d_model)
    bound2 = 1.0 / math.sqrt(d_ff)
    # Stored already transposed w.r.t. torch's nn.Linear weight layout.
    w1 = jax.random.uniform(k1, (d_model, d_ff), dtype, -bound1, bound1)
    b1 = jax.random.uniform(k2, (d_ff,), dtype, -bound1, bound1)
    w2 = jax.random.uniform(k3, (d_ff, d_model), dtype, -bound2, bound2)
    b2 = jax.random.uniform(k4, (d_model,), dtype, -bound2, bound2)
    return w1, b1, w2, b2


if __name__ == "__main__":
    batch, seq, d_model, d_ff = 2, 8, 32, 64

    key = jax.random.PRNGKey(0)
    kx, kp = jax.random.split(key)
    x = jax.random.normal(kx, (batch, seq, d_model), jnp.float32)
    w1, b1, w2, b2 = init_params(kp, d_model, d_ff)

    # --- f32 path: tight check against the exact reference -----------------------
    p32 = prepare_ffn_params(w1, b1, w2, b2,
                             param_dtype=jnp.float32, compute_dtype=jnp.float32)
    out32 = jax.block_until_ready(feed_forward_block(x, p32))
    ref32 = jnp.maximum(x @ w1 + b1, 0.0) @ w2 + b2
    assert out32.shape == (batch, seq, d_model)
    assert jnp.allclose(out32, ref32, atol=1e-4, rtol=1e-4)

    # --- bf16 fast path (production default): compare against a reference that
    #     mirrors the kernel's casting (bf16 operands, f32 accumulation) -----------
    pbf = prepare_ffn_params(w1, b1, w2, b2)   # bf16 weights / bf16 x, f32 acc
    outbf = jax.block_until_ready(feed_forward_block(x, pbf))
    xb = x.reshape(-1, d_model).astype(jnp.bfloat16)
    h_ref = jnp.maximum(
        jnp.dot(xb, w1.astype(jnp.bfloat16), preferred_element_type=jnp.float32) + b1,
        0.0)
    refbf = (jnp.dot(h_ref.astype(jnp.bfloat16), w2.astype(jnp.bfloat16),
                     preferred_element_type=jnp.float32) + b2)
    refbf = refbf.reshape(batch, seq, d_model).astype(x.dtype)
    assert outbf.shape == (batch, seq, d_model)
    assert jnp.allclose(outbf, refbf, atol=2e-2, rtol=2e-2)

    print("KERNEL_OK")
</pallas_src>

<mosaic_0001>
module attributes {stable_mosaic.version = 11 : i64} {
  func.func @ffn_kernel(%arg0: i32, %arg1: i32, %arg2: memref<16x128xf32, #tpu.memory_space<vmem>>, %arg3: memref<128x128xf32, #tpu.memory_space<vmem>>, %arg4: memref<1x128xf32, #tpu.memory_space<vmem>>, %arg5: memref<128x128xf32, #tpu.memory_space<vmem>>, %arg6: memref<1x128xf32, #tpu.memory_space<vmem>>, %arg7: memref<16x128xf32, #tpu.memory_space<vmem>>, %arg8: memref<16x128xf32, #tpu.memory_space<vmem>>) attributes {dimension_semantics = [#tpu.dimension_semantics<parallel>, #tpu.dimension_semantics<arbitrary>], iteration_bounds = array<i64: 1, 1>, scalar_prefetch = 0 : i64, scratch_operands = 1 : i64, tpu.core_type = #tpu.core_type<tc>, window_params = [{transform_indices = @transform_0, window_bounds = array<i64: 16, 128>}, {transform_indices = @transform_1, window_bounds = array<i64: 128, 128>}, {transform_indices = @transform_2, window_bounds = array<i64: 1, 128>}, {transform_indices = @transform_3, window_bounds = array<i64: 128, 128>}, {pipeline_mode = #tpu.pipeline_mode<synchronous>, transform_indices = @transform_4, window_bounds = array<i64: 1, 128>}, {transform_indices = @transform_5, window_bounds = array<i64: 16, 128>}]} {
    %c0_i32 = arith.constant 0 : i32
    %0 = arith.cmpi eq, %arg1, %c0_i32 : i32
    %1 = arith.extui %0 : i1 to i32
    %c0_i32_0 = arith.constant 0 : i32
    %2 = arith.cmpi ne, %1, %c0_i32_0 : i32
    scf.if %2 {
      %cst_16 = arith.constant 0.000000e+00 : f32
      %19 = vector.broadcast %cst_16 : f32 to vector<16x128xf32>
      %c0_17 = arith.constant 0 : index
      %c0_18 = arith.constant 0 : index
      %20 = vector.load %arg8[%c0_17, %c0_18] : memref<16x128xf32, #tpu.memory_space<vmem>>, vector<16x128xf32>
      tpu.vector_store %arg8[%c0_17, %c0_18], %19 {strides = array<i32>} : memref<16x128xf32, #tpu.memory_space<vmem>>, vector<16x128xf32>,
    } else {
    }
    %c0 = arith.constant 0 : index
    %c0_1 = arith.constant 0 : index
    %3 = vector.load %arg2[%c0, %c0_1] : memref<16x128xf32, #tpu.memory_space<vmem>>, vector<16x128xf32>
    %c0_2 = arith.constant 0 : index
    %c0_3 = arith.constant 0 : index
    %4 = vector.load %arg3[%c0_2, %c0_3] : memref<128x128xf32, #tpu.memory_space<vmem>>, vector<128x128xf32>
    %cst = arith.constant dense<0.000000e+00> : vector<16x128xf32>
    %5 = tpu.matmul %3, %4, %cst {dimension_numbers = #tpu.dot_dimension_numbers<[1], [0], [0], [1], [0, 0, 1, 1], [], []>} : vector<16x128xf32>, vector<128x128xf32>, vector<16x128xf32> -> vector<16x128xf32>
    %c0_4 = arith.constant 0 : index
    %c0_5 = arith.constant 0 : index
    %6 = vector.load %arg4[%c0_4, %c0_5] : memref<1x128xf32, #tpu.memory_space<vmem>>, vector<1x128xf32>
    %7 = vector.broadcast %6 : vector<1x128xf32> to vector<16x128xf32>
    %8 = arith.addf %5, %7 : vector<16x128xf32>
    %cst_6 = arith.constant 0.000000e+00 : f32
    %9 = vector.broadcast %cst_6 : f32 to vector<16x128xf32>
    %10 = arith.maximumf %8, %9 : vector<16x128xf32>
    %c0_7 = arith.constant 0 : index
    %c0_8 = arith.constant 0 : index
    %11 = vector.load %arg8[%c0_7, %c0_8] : memref<16x128xf32, #tpu.memory_space<vmem>>, vector<16x128xf32>
    %c0_9 = arith.constant 0 : index
    %c0_10 = arith.constant 0 : index
    %12 = vector.load %arg5[%c0_9, %c0_10] : memref<128x128xf32, #tpu.memory_space<vmem>>, vector<128x128xf32>
    %cst_11 = arith.constant dense<0.000000e+00> : vector<16x128xf32>
    %13 = tpu.matmul %10, %12, %cst_11 {dimension_numbers = #tpu.dot_dimension_numbers<[1], [0], [0], [1], [0, 0, 1, 1], [], []>} : vector<16x128xf32>, vector<128x128xf32>, vector<16x128xf32> -> vector<16x128xf32>
    %14 = arith.addf %11, %13 : vector<16x128xf32>
    %c0_12 = arith.constant 0 : index
    %c0_13 = arith.constant 0 : index
    %15 = vector.load %arg8[%c0_12, %c0_13] : memref<16x128xf32, #tpu.memory_space<vmem>>, vector<16x128xf32>
    tpu.vector_store %arg8[%c0_12, %c0_13], %14 {strides = array<i32>} : memref<16x128xf32, #tpu.memory_space<vmem>>, vector<16x128xf32>,
    %c0_i32_14 = arith.constant 0 : i32
    %16 = arith.cmpi eq, %arg1, %c0_i32_14 : i32
    %17 = arith.extui %16 : i1 to i32
    %c0_i32_15 = arith.constant 0 : i32
    %18 = arith.cmpi ne, %17, %c0_i32_15 : i32
    scf.if %18 {
      %c0_16 = arith.constant 0 : index
      %c0_17 = arith.constant 0 : index
      %19 = vector.load %arg8[%c0_16, %c0_17] : memref<16x128xf32, #tpu.memory_space<vmem>>, vector<16x128xf32>
      %c0_18 = arith.constant 0 : index
      %c0_19 = arith.constant 0 : index
      %20 = vector.load %arg6[%c0_18, %c0_19] : memref<1x128xf32, #tpu.memory_space<vmem>>, vector<1x128xf32>
      %21 = vector.broadcast %20 : vector<1x128xf32> to vector<16x128xf32>
      %22 = arith.addf %19, %21 : vector<16x128xf32>
      %c0_20 = arith.constant 0 : index
      %c0_21 = arith.constant 0 : index
      %23 = vector.load %arg7[%c0_20, %c0_21] : memref<16x128xf32, #tpu.memory_space<vmem>>, vector<16x128xf32>
      tpu.vector_store %arg7[%c0_20, %c0_21], %22 {strides = array<i32>} : memref<16x128xf32, #tpu.memory_space<vmem>>, vector<16x128xf32>,
    } else {
    }
    return
  }
  func.func @transform_0(%arg0: i32, %arg1: i32) -> (i32, i32) {
    %c0_i32 = arith.constant 0 : i32
    %c0_i32_0 = arith.constant 0 : i32
    return %arg0, %c0_i32 : i32, i32
  }
  func.func @transform_1(%arg0: i32, %arg1: i32) -> (i32, i32) {
    %c0_i32 = arith.constant 0 : i32
    %c0_i32_0 = arith.constant 0 : i32
    return %c0_i32, %arg1 : i32, i32
  }
  func.func @transform_2(%arg0: i32, %arg1: i32) -> (i32, i32) {
    %c0_i32 = arith.constant 0 : i32
    %c0_i32_0 = arith.constant 0 : i32
    return %c0_i32, %arg1 : i32, i32
  }
  func.func @transform_3(%arg0: i32, %arg1: i32) -> (i32, i32) {
    %c0_i32 = arith.constant 0 : i32
    %c0_i32_0 = arith.constant 0 : i32
    return %arg1, %c0_i32 : i32, i32
  }
  func.func @transform_4(%arg0: i32, %arg1: i32) -> (i32, i32) {
    %c0_i32 = arith.constant 0 : i32
    %c0_i32_0 = arith.constant 0 : i32
    %c0_i32_1 = arith.constant 0 : i32
    return %c0_i32, %c0_i32_0 : i32, i32
  }
  func.func @transform_5(%arg0: i32, %arg1: i32) -> (i32, i32) {
    %c0_i32 = arith.constant 0 : i32
    %c0_i32_0 = arith.constant 0 : i32
    return %arg0, %c0_i32 : i32, i32
  }
}

</mosaic_0001>

<llo_original>
// kernel: tpu_custom_call.1
$region0: #{tpu_custom_call.1}
  #allocation0 [shape = 'u32[]', space=smem, size = 0x4, offset = 0x4, fixed_abs, tag = 'smem constant byte address 0x4 - core index']
  #allocation1 [shape = 'u32[144,128]{1,0:T(1,128)}', space=vmem, size = 0x12000, scoped, tag = 'internal scratch']
  #allocation2 [shape = 'f32[16,128]{1,0:T(8,128)}', space=vmem, size = 0x2000, scoped, tag = 'scratch operand']
  %s0 = inlined_call_operand.hbm [shape: f32[16,128], index: 0, kind: input, shape index: {}]
  %s1 = inlined_call_operand.hbm [shape: f32[128,128], index: 1, kind: input, shape index: {}]
  %s2 = inlined_call_operand.vmem [shape: f32[1,128], index: 2, kind: input, shape index: {}]
  %s3 = inlined_call_operand.hbm [shape: f32[128,128], index: 3, kind: input, shape index: {}]
  %s4 = inlined_call_operand.vmem [shape: f32[1,128], index: 4, kind: input, shape index: {}]
  %s5 = inlined_call_operand.hbm [shape: f32[16,128], index: 5, kind: output, shape index: {}]
  %s6 = sld [smem:[#allocation0]]
  $region50: #{tpu_custom_call.1} parent=0
    _
  %s8 = ssub.s32 1, %s6
  %s9 = scalar_select 0, %s8, %s6
  $region1: #{tpu_custom_call.1} parent=0
    #allocation3 [shape = 'u8[8192]{0}', space=vmem, size = 0x2000, scoped, tag = 'input window, operand 0, single buffered']
    #allocation4 [shape = 's32[1]{0}', space=sflag, size = 0x4, scoped, tag = 'scoped memory for tpu_custom_call.1']
    #allocation5 [shape = 's32[1]{0}', space=sflag, size = 0x4, scoped, tag = 'scoped memory for tpu_custom_call.1']
    #allocation6 [shape = 'u8[65536]{0}', space=vmem, size = 0x10000, scoped, tag = 'input window, operand 1, single buffered']
    #allocation7 [shape = 's32[1]{0}', space=sflag, size = 0x4, scoped, tag = 'scoped memory for tpu_custom_call.1']
    #allocation8 [shape = 'u8[65536]{0}', space=vmem, size = 0x10000, scoped, tag = 'input window, operand 3, single buffered']
    #allocation9 [shape = 'u8[8192]{0}', space=vmem, size = 0x2000, scoped, tag = 'output window, operand 0, single buffered']
    %10 = vsyncpa [#allocation4], 0
    %11 = vsyncpa [#allocation7], 0
    %12 = vsyncpa [#allocation5], 0
    // Predicated region
    $region2: #{tpu_custom_call.1} parent=1 // pred_check
      _
    $region3: #{tpu_custom_call.1} parent=1 // pred_check_branch
      %14 = sbr.rel (0) target = $region5
    $region4: #{tpu_custom_call.1} parent=1 // pred_region
      %s16 = ssub.s32 256, 256
      %17 = vsyncadd [#allocation4], %s16
      %s18 = sshll.u32 [#allocation3], 4
      %s19 = int_to_ptr.vmem [resolvable:$true] %s18
      %24 = dma.hbm_to_vmem [thread:$0]  %s0, 256, %s19, [#allocation4], 128, 128, 8
    $region5: #{tpu_custom_call.1} parent=1 // pred_fallthru
      _
    // Predicated region
    $region6: #{tpu_custom_call.1} parent=1 // pred_check
      _
    $region7: #{tpu_custom_call.1} parent=1 // pred_check_branch
      %26 = sbr.rel (0) target = $region9
    $region8: #{tpu_custom_call.1} parent=1 // pred_region
      %s28 = ssub.s32 2048, 2048
      %29 = vsyncadd [#allocation7], %s28
      %s30 = sshll.u32 [#allocation6], 4
      %s31 = int_to_ptr.vmem [resolvable:$true] %s30
      %36 = dma.hbm_to_vmem [thread:$0]  %s1, 2048, %s31, [#allocation7], 128, 128, 8
    $region9: #{tpu_custom_call.1} parent=1 // pred_fallthru
      _
    // Predicated region
    $region10: #{tpu_custom_call.1} parent=1 // pred_check
      _
    $region11: #{tpu_custom_call.1} parent=1 // pred_check_branch
      %38 = sbr.rel (0) target = $region13
    $region12: #{tpu_custom_call.1} parent=1 // pred_region
      _
    $region13: #{tpu_custom_call.1} parent=1 // pred_fallthru
      _
    // Predicated region
    $region14: #{tpu_custom_call.1} parent=1 // pred_check
      _
    $region15: #{tpu_custom_call.1} parent=1 // pred_check_branch
      %40 = sbr.rel (0) target = $region17
    $region16: #{tpu_custom_call.1} parent=1 // pred_region
      %s42 = ssub.s32 2048, 2048
      %43 = vsyncadd [#allocation7], %s42
      %s44 = sshll.u32 [#allocation8], 4
      %s45 = int_to_ptr.vmem [resolvable:$true] %s44
      %50 = dma.hbm_to_vmem [thread:$0]  %s3, 2048, %s45, [#allocation7], 128, 128, 8
    $region17: #{tpu_custom_call.1} parent=1 // pred_fallthru
      _
    // Predicated region
    $region18: #{tpu_custom_call.1} parent=1 // pred_check
      _
    $region19: #{tpu_custom_call.1} parent=1 // pred_check_branch
      %52 = sbr.rel (0) target = $region21
    $region20: #{tpu_custom_call.1} parent=1 // pred_region
      _
    $region21: #{tpu_custom_call.1} parent=1 // pred_fallthru
      _
    // Predicated region
    $region22: #{tpu_custom_call.1} parent=1 // pred_check
      _
    $region23: #{tpu_custom_call.1} parent=1 // pred_check_branch
      %54 = sbr.rel (0) target = $region25
    $region24: #{tpu_custom_call.1} parent=1 // pred_region
      %55 = dma.done [#allocation4], 256
    $region25: #{tpu_custom_call.1} parent=1 // pred_fallthru
      _
    // Predicated region
    $region26: #{tpu_custom_call.1} parent=1 // pred_check
      _
    $region27: #{tpu_custom_call.1} parent=1 // pred_check_branch
      %57 = sbr.rel (0) target = $region29
    $region28: #{tpu_custom_call.1} parent=1 // pred_region
      %58 = dma.done [#allocation7], 2048
    $region29: #{tpu_custom_call.1} parent=1 // pred_fallthru
      _
    // Predicated region
    $region30: #{tpu_custom_call.1} parent=1 // pred_check
      _
    $region31: #{tpu_custom_call.1} parent=1 // pred_check_branch
      %60 = sbr.rel (0) target = $region33
    $region32: #{tpu_custom_call.1} parent=1 // pred_region
      %61 = dma.done [#allocation7], 2048
    $region33: #{tpu_custom_call.1} parent=1 // pred_fallthru
      _
    %p62 = scmp.eq.s32.totalorder 0, 0
    // Predicated region
    $region34: #{tpu_custom_call.1} parent=1 // pred_check
      %p63 = pneg %p62
    $region35: #{tpu_custom_call.1} parent=1 // pred_check_branch
      %65 = sbr.rel (%p63) target = $region37
    $region36: #{tpu_custom_call.1} parent=1 // pred_region
      %66 = vst [vmem:[#allocation2] sm:$0xff] 0.0
      %67 = vst [vmem:[#allocation2 + $0x8] sm:$0xff] 0.0
    $region37: #{tpu_custom_call.1} parent=1 // pred_fallthru
      _
    %v68 = vld [vmem:[#allocation3] sm:$0xff]
    %v69 = vld [vmem:[#allocation3 + $0x8] sm:$0xff]
    %v70 = vld [vmem:[#allocation6] sm:$0xff]
    %v71 = vld [vmem:[#allocation6 + $0x8] sm:$0xff]
    %v72 = vld [vmem:[#allocation6 + $0x10] sm:$0xff]
    %v73 = vld [vmem:[#allocation6 + $0x18] sm:$0xff]
    %v74 = vld [vmem:[#allocation6 + $0x20] sm:$0xff]
    %v75 = vld [vmem:[#allocation6 + $0x28] sm:$0xff]
    %v76 = vld [vmem:[#allocation6 + $0x30] sm:$0xff]
    %v77 = vld [vmem:[#allocation6 + $0x38] sm:$0xff]
    %v78 = vld [vmem:[#allocation6 + $0x40] sm:$0xff]
    %v79 = vld [vmem:[#allocation6 + $0x48] sm:$0xff]
    %v80 = vld [vmem:[#allocation6 + $0x50] sm:$0xff]
    %v81 = vld [vmem:[#allocation6 + $0x58] sm:$0xff]
    %v82 = vld [vmem:[#allocation6 + $0x60] sm:$0xff]
    %v83 = vld [vmem:[#allocation6 + $0x68] sm:$0xff]
    %v84 = vld [vmem:[#allocation6 + $0x70] sm:$0xff]
    %v85 = vld [vmem:[#allocation6 + $0x78] sm:$0xff]
    %v86 = vld [vmem:[%s2] sm:$0x1]
    %v88 = vlaneseq
    %v89 = vshrl.u32 %v88, 7
    %v90 = vsub.s32 0, %v89
    %v91 = vrot.slane %v86, %v90
    %93 = vmatprep.subr.mxu0 0.0
    %94 = vmatpush1.msra.mxu0 %v85
    %95 = vmatprep.subr.mxu0 0.0
    %96 = vmatpush1.msra.mxu0 %v84
    %97 = vmatprep.subr.mxu0 0.0
    %98 = vmatpush1.msra.mxu0 %v83
    %99 = vmatprep.subr.mxu0 0.0
    %100 = vmatpush1.msra.mxu0 %v82
    %101 = vmatprep.subr.mxu0 0.0
    %102 = vmatpush1.msra.mxu0 %v81
    %103 = vmatprep.subr.mxu0 0.0
    %104 = vmatpush1.msra.mxu0 %v80
    %105 = vmatprep.subr.mxu0 0.0
    %106 = vmatpush1.msra.mxu0 %v79
    %107 = vmatprep.subr.mxu0 0.0
    %108 = vmatpush1.msra.mxu0 %v78
    %109 = vmatprep.subr.mxu0 0.0
    %110 = vmatpush1.msra.mxu0 %v77
    %111 = vmatprep.subr.mxu0 0.0
    %112 = vmatpush1.msra.mxu0 %v76
    %113 = vmatprep.subr.mxu0 0.0
    %114 = vmatpush1.msra.mxu0 %v75
    %115 = vmatprep.subr.mxu0 0.0
    %116 = vmatpush1.msra.mxu0 %v74
    %117 = vmatprep.subr.mxu0 0.0
    %118 = vmatpush1.msra.mxu0 %v73
    %119 = vmatprep.subr.mxu0 0.0
    %120 = vmatpush1.msra.mxu0 %v72
    %121 = vmatprep.subr.mxu0 0.0
    %122 = vmatpush1.msra.mxu0 %v71
    %123 = vmatprep.subr.mxu0 0.0
    %124 = vmatpush1.msra.mxu0 %v70
    %125 = vmatprep.subr.mxu0 0.0
    %126 = vmatpush2.msra.mxu0 0.0
    %127 = vmatprep.subr.mxu0 0.0
    %128 = vmatpush2.msra.mxu0 0.0
    %129 = vmatprep.subr.mxu0 0.0
    %130 = vmatpush2.msra.mxu0 0.0
    %131 = vmatprep.subr.mxu0 0.0
    %132 = vmatpush2.msra.mxu0 0.0
    %133 = vmatprep.subr.mxu0 0.0
    %134 = vmatpush2.msra.mxu0 0.0
    %135 = vmatprep.subr.mxu0 0.0
    %136 = vmatpush2.msra.mxu0 0.0
    %137 = vmatprep.subr.mxu0 0.0
    %138 = vmatpush2.msra.mxu0 0.0
    %139 = vmatprep.subr.mxu0 0.0
    %140 = vmatpush2.msra.mxu0 0.0
    %141 = vmatprep.subr.mxu0 0.0
    %142 = vmatpush2.msra.mxu0 0.0
    %143 = vmatprep.subr.mxu0 0.0
    %144 = vmatpush2.msra.mxu0 0.0
    %145 = vmatprep.subr.mxu0 0.0
    %146 = vmatpush2.msra.mxu0 0.0
    %147 = vmatprep.subr.mxu0 0.0
    %148 = vmatpush2.msra.mxu0 0.0
    %149 = vmatprep.subr.mxu0 0.0
    %150 = vmatpush2.msra.mxu0 0.0
    %151 = vmatprep.subr.mxu0 0.0
    %152 = vmatpush2.msra.mxu0 0.0
    %153 = vmatprep.subr.mxu0 0.0
    %154 = vmatpush2.msra.mxu0 0.0
    %155 = vmatprep.subr.mxu0 0.0
    %156 = vmatpush2.msra.mxu0 0.0
    %157 = vmatprep.mubr.f32.mxu0 0.0
    %158 = vmatmul.mubr.f32.gmra.mxu0 %v68
    %v159 = vpop.f32.mrf.mxu0
    %v160 = vadd.f32 %v91, %v159
    %v161 = vpop.f32.mrf.mxu0
    %162 = vmatprep.mubr.f32.mxu0 0.0
    %163 = vmatmul.mubr.f32.gmra.mxu0 %v69
    %v164 = vpop.f32.mrf.mxu0
    %v165 = vadd.f32 %v91, %v164
    %v166 = vpop.f32.mrf.mxu0
    %167 = vdwg.mxu0
    %v168 = vmax.f32 %v160, 0.0
    %v169 = vmax.f32 %v165, 0.0
    %v170 = vld [vmem:[#allocation2] sm:$0xff]
    %v171 = vld [vmem:[#allocation2 + $0x8] sm:$0xff]
    %v172 = vld [vmem:[#allocation8] sm:$0xff]
    %v173 = vld [vmem:[#allocation8 + $0x8] sm:$0xff]
    %v174 = vld [vmem:[#allocation8 + $0x10] sm:$0xff]
    %v175 = vld [vmem:[#allocation8 + $0x18] sm:$0xff]
    %v176 = vld [vmem:[#allocation8 + $0x20] sm:$0xff]
    %v177 = vld [vmem:[#allocation8 + $0x28] sm:$0xff]
    %v178 = vld [vmem:[#allocation8 + $0x30] sm:$0xff]
    %v179 = vld [vmem:[#allocation8 + $0x38] sm:$0xff]
    %v180 = vld [vmem:[#allocation8 + $0x40] sm:$0xff]
    %v181 = vld [vmem:[#allocation8 + $0x48] sm:$0xff]
    %v182 = vld [vmem:[#allocation8 + $0x50] sm:$0xff]
    %v183 = vld [vmem:[#allocation8 + $0x58] sm:$0xff]
    %v184 = vld [vmem:[#allocation8 + $0x60] sm:$0xff]
    %v185 = vld [vmem:[#allocation8 + $0x68] sm:$0xff]
    %v186 = vld [vmem:[#allocation8 + $0x70] sm:$0xff]
    %v187 = vld [vmem:[#allocation8 + $0x78] sm:$0xff]
    %188 = vmatprep.subr.mxu0 0.0
    %189 = vmatpush1.msra.mxu0 %v187
    %190 = vmatprep.subr.mxu0 0.0
    %191 = vmatpush1.msra.mxu0 %v186
    %192 = vmatprep.subr.mxu0 0.0
    %193 = vmatpush1.msra.mxu0 %v185
    %194 = vmatprep.subr.mxu0 0.0
    %195 = vmatpush1.msra.mxu0 %v184
    %196 = vmatprep.subr.mxu0 0.0
    %197 = vmatpush1.msra.mxu0 %v183
    %198 = vmatprep.subr.mxu0 0.0
    %199 = vmatpush1.msra.mxu0 %v182
    %200 = vmatprep.subr.mxu0 0.0
    %201 = vmatpush1.msra.mxu0 %v181
    %202 = vmatprep.subr.mxu0 0.0
    %203 = vmatpush1.msra.mxu0 %v180
    %204 = vmatprep.subr.mxu0 0.0
    %205 = vmatpush1.msra.mxu0 %v179
    %206 = vmatprep.subr.mxu0 0.0
    %207 = vmatpush1.msra.mxu0 %v178
    %208 = vmatprep.subr.mxu0 0.0
    %209 = vmatpush1.msra.mxu0 %v177
    %210 = vmatprep.subr.mxu0 0.0
    %211 = vmatpush1.msra.mxu0 %v176
    %212 = vmatprep.subr.mxu0 0.0
    %213 = vmatpush1.msra.mxu0 %v175
    %214 = vmatprep.subr.mxu0 0.0
    %215 = vmatpush1.msra.mxu0 %v174
    %216 = vmatprep.subr.mxu0 0.0
    %217 = vmatpush1.msra.mxu0 %v173
    %218 = vmatprep.subr.mxu0 0.0
    %219 = vmatpush1.msra.mxu0 %v172
    %220 = vmatprep.subr.mxu0 0.0
    %221 = vmatpush2.msra.mxu0 0.0
    %222 = vmatprep.subr.mxu0 0.0
    %223 = vmatpush2.msra.mxu0 0.0
    %224 = vmatprep.subr.mxu0 0.0
    %225 = vmatpush2.msra.mxu0 0.0
    %226 = vmatprep.subr.mxu0 0.0
    %227 = vmatpush2.msra.mxu0 0.0
    %228 = vmatprep.subr.mxu0 0.0
    %229 = vmatpush2.msra.mxu0 0.0
    %230 = vmatprep.subr.mxu0 0.0
    %231 = vmatpush2.msra.mxu0 0.0
    %232 = vmatprep.subr.mxu0 0.0
    %233 = vmatpush2.msra.mxu0 0.0
    %234 = vmatprep.subr.mxu0 0.0
    %235 = vmatpush2.msra.mxu0 0.0
    %236 = vmatprep.subr.mxu0 0.0
    %237 = vmatpush2.msra.mxu0 0.0
    %238 = vmatprep.subr.mxu0 0.0
    %239 = vmatpush2.msra.mxu0 0.0
    %240 = vmatprep.subr.mxu0 0.0
    %241 = vmatpush2.msra.mxu0 0.0
    %242 = vmatprep.subr.mxu0 0.0
    %243 = vmatpush2.msra.mxu0 0.0
    %244 = vmatprep.subr.mxu0 0.0
    %245 = vmatpush2.msra.mxu0 0.0
    %246 = vmatprep.subr.mxu0 0.0
    %247 = vmatpush2.msra.mxu0 0.0
    %248 = vmatprep.subr.mxu0 0.0
    %249 = vmatpush2.msra.mxu0 0.0
    %250 = vmatprep.subr.mxu0 0.0
    %251 = vmatpush2.msra.mxu0 0.0
    %252 = vmatprep.mubr.f32.mxu0 0.0
    %253 = vmatmul.mubr.f32.gmra.mxu0 %v168
    %v254 = vpop.f32.mrf.mxu0
    %v255 = vadd.f32 0.0, %v254
    %v256 = vpop.f32.mrf.mxu0
    %257 = vmatprep.mubr.f32.mxu0 0.0
    %258 = vmatmul.mubr.f32.gmra.mxu0 %v169
    %v259 = vpop.f32.mrf.mxu0
    %v260 = vadd.f32 0.0, %v259
    %v261 = vpop.f32.mrf.mxu0
    %262 = vdwg.mxu0
    %v263 = vadd.f32 %v170, %v255
    %v264 = vadd.f32 %v171, %v260
    %265 = vst [vmem:[#allocation2] sm:$0xff] %v263
    %266 = vst [vmem:[#allocation2 + $0x8] sm:$0xff] %v264
    // Predicated region
    $region38: #{tpu_custom_call.1} parent=1 // pred_check
      %p267 = pneg %p62
    $region39: #{tpu_custom_call.1} parent=1 // pred_check_branch
      %269 = sbr.rel (%p267) target = $region41
    $region40: #{tpu_custom_call.1} parent=1 // pred_region
      %v270 = vld [vmem:[#allocation2] sm:$0xff]
      %v271 = vld [vmem:[#allocation2 + $0x8] sm:$0xff]
      %v272 = vld [vmem:[%s4] sm:$0x1]
      %v274 = vlaneseq
      %v275 = vshrl.u32 %v274, 7
      %v276 = vsub.s32 0, %v275
      %v277 = vrot.slane %v272, %v276
      %v279 = vadd.f32 %v270, %v277
      %v280 = vadd.f32 %v271, %v277
      %281 = vst [vmem:[#allocation9] sm:$0xff] %v279
      %282 = vst [vmem:[#allocation9 + $0x8] sm:$0xff] %v280
    $region41: #{tpu_custom_call.1} parent=1 // pred_fallthru
      _
    // Predicated region
    $region42: #{tpu_custom_call.1} parent=1 // pred_check
      _
    $region43: #{tpu_custom_call.1} parent=1 // pred_check_branch
      %284 = sbr.rel (0) target = $region45
    $region44: #{tpu_custom_call.1} parent=1 // pred_region
      %s286 = ssub.s32 256, 256
      %287 = vsyncadd [#allocation5], %s286
      %s288 = sshll.u32 [#allocation9], 4
      %s289 = int_to_ptr.vmem [resolvable:$true] %s288
      %294 = dma.vmem_to_hbm [thread:$0]  %s289, 256, %s5, [#allocation5], 128, 128, 8
    $region45: #{tpu_custom_call.1} parent=1 // pred_fallthru
      _
    // Predicated region
    $region46: #{tpu_custom_call.1} parent=1 // pred_check
      _
    $region47: #{tpu_custom_call.1} parent=1 // pred_check_branch
      %296 = sbr.rel (0) target = $region49
    $region48: #{tpu_custom_call.1} parent=1 // pred_region
      %297 = dma.done [#allocation5], 256
    $region49: #{tpu_custom_call.1} parent=1 // pred_fallthru
      _
    %298 = vsyncpa [#allocation4], 1
    %299 = vsyncpa [#allocation7], 1
    %300 = vsyncpa [#allocation5], 1

</llo_original>
